<compile_context>
chip_gen: v5e
topology: v5e:2x2
jax: 0.10.0
libtpu: 0.0.40
codegen_flags: <defaults>
</compile_context>

<pallas_src>
import math

import jax
import jax.numpy as jnp
from jax import lax
from jax.experimental import pallas as pl
from jax.experimental.pallas import tpu as pltpu


_TILE_HW_MAX = 2048                    # per review: 1024-2048 output rows / block
_HW_ALIGN = 16                         # sublane-safe for fp32 and bf16 packing
_VMEM_TILE_BUDGET = 24 * 1024 * 1024   # double-buffered block budget (v7x-safe)
_RESIDENT_W_BYTES = 2 * 1024 * 1024    # keep whole folded weight resident below this


def _round_up(v: int, m: int) -> int:
    return ((v + m - 1) // m) * m


def _im2col_matmul_kernel(x_ref, w_ref, b_ref, o_ref):
    # x_ref: (1, tile_hw, K8)   im2col rows for this (batch, hw-tile) block
    # w_ref: (K8, tile_n)       folded conv weights for this C_out tile
    # b_ref: (1, tile_n)        bias (fp32)
    # o_ref: (1, tile_hw, tile_n)
    acc = jnp.dot(x_ref[0], w_ref[...], preferred_element_type=jnp.float32)
    o_ref[0] = (acc + b_ref[...]).astype(o_ref.dtype)


def downsampling_forward(x, weight, bias, *, stride, padding,
                         pre_permute=False, compute_dtype=None,
                         max_resident_weight_bytes=_RESIDENT_W_BYTES):
    """Pallas implementation of Downsampling.forward.

    x      : (B, C_in, H, W) NCHW (or (B, L, C_in) if pre_permute=True)
    weight : (C_out, C_in, KH, KW)  (PyTorch Conv2d layout)
    bias   : (C_out,)
    returns: (B, H_out*W_out, C_out)
    """
    # pre_norm = Identity (default pre_norm=None)
    if pre_permute:
        B, L, C = x.shape
        H = int(round(math.sqrt(L)))
        assert H * H == L, f"pre_permute requires a square token grid, got L={L}"
        x = jnp.transpose(x, (0, 2, 1)).reshape(B, C, H, H)

    B, C_in, H, W = x.shape
    C_out, _, KH, KW = weight.shape
    H_out = (H + 2 * padding - KH) // stride + 1
    W_out = (W + 2 * padding - KW) // stride + 1
    HW = H_out * W_out
    K = KH * KW * C_in

    out_dtype = x.dtype
    if compute_dtype is None:
        # bf16 operands by default (fp32 accumulation): halves HBM bytes on a
        # memory-bound kernel, hits MXU bf16 peak on v6e/v7x.
        cdt = jnp.bfloat16 if x.dtype == jnp.float32 else x.dtype
    else:
        cdt = compute_dtype
    in_bytes = jnp.dtype(cdt).itemsize
    out_bytes = jnp.dtype(out_dtype).itemsize

    # NCHW -> NHWC (channels on lanes) + spatial zero-pad: data-movement glue.
    x_nhwc = jnp.transpose(x, (0, 2, 3, 1))
    x_pad = jnp.pad(
        x_nhwc, ((0, 0), (padding, padding), (padding, padding), (0, 0))
    )

    # im2col: fold the KH*KW taps into the channel (contraction) dimension.
    # TODO(synk): do this gather in-kernel (pl.ANY + overlapping row-band DMA)
    # to avoid the KH*KW/stride^2 HBM duplication + extra materialization pass.
    cols = []
    for kh in range(KH):
        for kw in range(KW):
            cols.append(
                x_pad[
                    :,
                    kh: kh + (H_out - 1) * stride + 1: stride,
                    kw: kw + (W_out - 1) * stride + 1: stride,
                    :,
                ]
            )
    x_cols = jnp.concatenate(cols, axis=-1).reshape(B, HW, K).astype(cdt)

    # Conv weights folded in the same (kh, kw, c_in) order: (K, C_out).
    w_mat = jnp.transpose(weight, (2, 3, 1, 0)).reshape(K, C_out).astype(cdt)
    b_mat = bias.reshape(1, C_out).astype(jnp.float32)

    # Contraction dim: sublane-align only (multiple of 8); NOT padded to 128.
    # The last/second-to-last block dims below equal the full array dims, so
    # the (8,128) BlockSpec rule is satisfied via the full-dim exemption.
    K8 = _round_up(K, 8)
    if K8 != K:
        x_cols = jnp.pad(x_cols, ((0, 0), (0, 0), (0, K8 - K)))
        w_mat = jnp.pad(w_mat, ((0, K8 - K), (0, 0)))

    # Output-channel blocking: keep the whole folded weight resident (single n
    # tile, unpadded C_out output -> no trailing slice pass) when it is small;
    # otherwise tile N (256-wide for the v6e/v7x MXU when it divides evenly).
    resident = C_out * K8 * in_bytes <= max_resident_weight_bytes
    if resident:
        tile_n = C_out
        N_arr = C_out
    else:
        tile_n = 256 if C_out % 256 == 0 else 128
        N_arr = _round_up(C_out, tile_n)
        if N_arr != C_out:
            w_mat = jnp.pad(w_mat, ((0, 0), (0, N_arr - C_out)))
            b_mat = jnp.pad(b_mat, ((0, 0), (0, N_arr - C_out)))
    n_steps = N_arr // tile_n

    # HW tiling: biggest tile (cap 2048) whose double-buffered in+out blocks
    # (+ weight + bias) fit the v7x-safe VMEM budget.
    # TODO(synk): for very large K (K8*tile_hw blocks that would not fit), add
    # a K grid axis marked "arbitrary" with a VMEM fp32 accumulator.
    w_block_bytes = K8 * tile_n * in_bytes
    b_block_bytes = tile_n * 4
    row_bytes = 2 * K8 * in_bytes + 2 * tile_n * out_bytes
    avail = max(_VMEM_TILE_BUDGET - 2 * (w_block_bytes + b_block_bytes),
                _HW_ALIGN * row_bytes)
    tile_hw = min(_TILE_HW_MAX,
                  max(_HW_ALIGN, (avail // row_bytes) // _HW_ALIGN * _HW_ALIGN))
    if HW <= tile_hw:
        tile_hw = HW            # full-dim block (exempt from the 8-mult rule)
    hw_steps = pl.cdiv(HW, tile_hw)

    # v7x has 2 TensorCores: keep >=2 parallel grid steps when possible.
    if B * hw_steps * n_steps == 1 and HW >= 2 * _HW_ALIGN:
        tile_hw = min(tile_hw, _round_up(pl.cdiv(HW, 2), _HW_ALIGN))
        hw_steps = pl.cdiv(HW, tile_hw)

    grid = (B, hw_steps, n_steps)   # n fastest: big im2col block stays resident

    in_block_bytes = tile_hw * K8 * in_bytes
    out_block_bytes = tile_hw * tile_n * out_bytes
    working = 2 * (in_block_bytes + out_block_bytes + w_block_bytes + b_block_bytes)
    vmem_limit = int(min(max(working * 5 // 4, 32 * 1024 * 1024),
                         64 * 1024 * 1024))

    cost = pl.CostEstimate(
        flops=2 * B * HW * K * C_out,
        transcendentals=0,
        bytes_accessed=int(B * HW * K8 * in_bytes            # im2col read
                           + K8 * N_arr * in_bytes           # weight
                           + N_arr * 4                       # bias
                           + B * HW * N_arr * out_bytes),    # output write
    )

    out_padded = pl.pallas_call(
        _im2col_matmul_kernel,
        out_shape=jax.ShapeDtypeStruct((B, HW, N_arr), out_dtype),
        grid=grid,
        in_specs=[
            pl.BlockSpec((1, tile_hw, K8), lambda b, h, n: (b, h, 0)),
            pl.BlockSpec((K8, tile_n), lambda b, h, n: (0, n)),
            pl.BlockSpec((1, tile_n), lambda b, h, n: (0, n)),
        ],
        out_specs=pl.BlockSpec((1, tile_hw, tile_n), lambda b, h, n: (b, h, n)),
        compiler_params=pltpu.CompilerParams(
            dimension_semantics=("parallel", "parallel", "parallel"),
            vmem_limit_bytes=vmem_limit,
        ),
        cost_estimate=cost,
    )(x_cols, w_mat, b_mat)

    out = out_padded[:, :, :C_out] if N_arr != C_out else out_padded
    # post_norm = Identity (default post_norm=None)
    return out


def _reference_forward(x, weight, bias, *, stride, padding):
    """Plain-JAX reference mirroring the PyTorch forward (for verification)."""
    y = lax.conv_general_dilated(
        x,
        weight,
        window_strides=(stride, stride),
        padding=((padding, padding), (padding, padding)),
        dimension_numbers=("NCHW", "OIHW", "NCHW"),
    )
    y = y + bias[None, :, None, None]
    B, C, Ho, Wo = y.shape
    return jnp.transpose(y.reshape(B, C, Ho * Wo), (0, 2, 1))


if __name__ == "__main__":
    def _run_case(key, *, B, C_in, H, W, C_out, KH, KW, stride, padding,
                  compute_dtype=None, max_resident_weight_bytes=None, atol=5e-3):
        kx, kw_, kb = jax.random.split(key, 3)
        x = jax.random.normal(kx, (B, C_in, H, W), dtype=jnp.float32)
        fan_in = C_in * KH * KW
        bound = 1.0 / math.sqrt(fan_in)
        weight = jax.random.uniform(
            kw_, (C_out, C_in, KH, KW), minval=-bound, maxval=bound,
            dtype=jnp.float32,
        )
        bias = jax.random.uniform(
            kb, (C_out,), minval=-bound, maxval=bound, dtype=jnp.float32
        )

        kwargs = {}
        if max_resident_weight_bytes is not None:
            kwargs["max_resident_weight_bytes"] = max_resident_weight_bytes
        out = downsampling_forward(x, weight, bias, stride=stride,
                                   padding=padding, compute_dtype=compute_dtype,
                                   **kwargs)
        out = jax.block_until_ready(out)

        # Reference uses the same operand dtype as the kernel (bf16 by default)
        # with fp32 accumulation, mirroring preferred_element_type.
        cdt = compute_dtype if compute_dtype is not None else jnp.bfloat16
        ref = _reference_forward(
            x.astype(cdt).astype(jnp.float32),
            weight.astype(cdt).astype(jnp.float32),
            bias, stride=stride, padding=padding,
        )
        H_out = (H + 2 * padding - KH) // stride + 1
        W_out = (W + 2 * padding - KW) // stride + 1
        assert out.shape == (B, H_out * W_out, C_out), out.shape
        err = float(jnp.max(jnp.abs(out - ref)))
        assert jnp.allclose(out, ref, atol=atol, rtol=atol), err

    key = jax.random.PRNGKey(0)
    k1, k2, k3, k4, k5 = jax.random.split(key, 5)
    # Downsampling(4 -> 8, k=3, s=2, p=1) on 16x16 NCHW, bf16 operands (default).
    _run_case(k1, B=2, C_in=4, H=16, W=16, C_out=8, KH=3, KW=3,
              stride=2, padding=1)
    # Same case with fp32 operands (tight-tolerance path).
    _run_case(k2, B=2, C_in=4, H=16, W=16, C_out=8, KH=3, KW=3,
              stride=2, padding=1, compute_dtype=jnp.float32, atol=1e-4)
    # Stem-like Downsampling(3 -> 8, k=7, s=4, p=2).
    _run_case(k3, B=2, C_in=3, H=16, W=16, C_out=8, KH=7, KW=7,
              stride=4, padding=2)
    # Tiled-N path with channel padding + trailing slice (C_out=200 -> 256).
    _run_case(k4, B=2, C_in=8, H=16, W=16, C_out=200, KH=3, KW=3,
              stride=2, padding=1, max_resident_weight_bytes=0)
    # Tiled-N path with tile_n=256 (C_out a multiple of 256).
    _run_case(k5, B=2, C_in=8, H=16, W=16, C_out=512, KH=3, KW=3,
              stride=2, padding=1, max_resident_weight_bytes=0)
    print("KERNEL_OK")
</pallas_src>

<mosaic_0001>
module attributes {stable_mosaic.version = 11 : i64} {
  func.func @_im2col_matmul_kernel(%arg0: i32, %arg1: i32, %arg2: i32, %arg3: memref<1x64x40xbf16, #tpu.memory_space<vmem>>, %arg4: memref<40x8xbf16, #tpu.memory_space<vmem>>, %arg5: memref<1x8xf32, #tpu.memory_space<vmem>>, %arg6: memref<1x64x8xf32, #tpu.memory_space<vmem>>) attributes {dimension_semantics = [#tpu.dimension_semantics<parallel>, #tpu.dimension_semantics<parallel>, #tpu.dimension_semantics<parallel>], iteration_bounds = array<i64: 2, 1, 1>, scalar_prefetch = 0 : i64, scratch_operands = 0 : i64, tpu.core_type = #tpu.core_type<tc>, window_params = [{transform_indices = @transform_0, window_bounds = array<i64: 1, 64, 40>}, {transform_indices = @transform_1, window_bounds = array<i64: 40, 8>}, {transform_indices = @transform_2, window_bounds = array<i64: 1, 8>}, {transform_indices = @transform_3, window_bounds = array<i64: 1, 64, 8>}]} {
    %c0 = arith.constant 0 : index
    %c0_0 = arith.constant 0 : index
    %c0_1 = arith.constant 0 : index
    %0 = vector.load %arg3[%c0, %c0_0, %c0_1] : memref<1x64x40xbf16, #tpu.memory_space<vmem>>, vector<1x64x40xbf16>
    %1 = vector.shape_cast %0 : vector<1x64x40xbf16> to vector<64x40xbf16>
    %c0_2 = arith.constant 0 : index
    %c0_3 = arith.constant 0 : index
    %2 = vector.load %arg4[%c0_2, %c0_3] : memref<40x8xbf16, #tpu.memory_space<vmem>>, vector<40x8xbf16>
    %cst = arith.constant dense<0.000000e+00> : vector<64x8xf32>
    %3 = tpu.matmul %1, %2, %cst {dimension_numbers = #tpu.dot_dimension_numbers<[1], [0], [0], [1], [0, 0, 1, 1], [], []>} : vector<64x40xbf16>, vector<40x8xbf16>, vector<64x8xf32> -> vector<64x8xf32>
    %c0_4 = arith.constant 0 : index
    %c0_5 = arith.constant 0 : index
    %4 = vector.load %arg5[%c0_4, %c0_5] : memref<1x8xf32, #tpu.memory_space<vmem>>, vector<1x8xf32>
    %5 = vector.broadcast %4 : vector<1x8xf32> to vector<64x8xf32>
    %6 = arith.addf %3, %5 : vector<64x8xf32>
    %c0_6 = arith.constant 0 : index
    %c0_7 = arith.constant 0 : index
    %c0_8 = arith.constant 0 : index
    %7 = vector.load %arg6[%c0_6, %c0_7, %c0_8] : memref<1x64x8xf32, #tpu.memory_space<vmem>>, vector<1x64x8xf32>
    %8 = vector.shape_cast %7 : vector<1x64x8xf32> to vector<64x8xf32>
    %9 = vector.shape_cast %6 : vector<64x8xf32> to vector<1x64x8xf32>
    tpu.vector_store %arg6[%c0_6, %c0_7, %c0_8], %9 {strides = array<i32>} : memref<1x64x8xf32, #tpu.memory_space<vmem>>, vector<1x64x8xf32>,
    return
  }
  func.func @transform_0(%arg0: i32, %arg1: i32, %arg2: i32) -> (i32, i32, i32) {
    %c0_i32 = arith.constant 0 : i32
    %c0_i32_0 = arith.constant 0 : i32
    return %arg0, %arg1, %c0_i32 : i32, i32, i32
  }
  func.func @transform_1(%arg0: i32, %arg1: i32, %arg2: i32) -> (i32, i32) {
    %c0_i32 = arith.constant 0 : i32
    %c0_i32_0 = arith.constant 0 : i32
    return %c0_i32, %arg2 : i32, i32
  }
  func.func @transform_2(%arg0: i32, %arg1: i32, %arg2: i32) -> (i32, i32) {
    %c0_i32 = arith.constant 0 : i32
    %c0_i32_0 = arith.constant 0 : i32
    return %c0_i32, %arg2 : i32, i32
  }
  func.func @transform_3(%arg0: i32, %arg1: i32, %arg2: i32) -> (i32, i32, i32) {
    %c0_i32 = arith.constant 0 : i32
    return %arg0, %arg1, %arg2 : i32, i32, i32
  }
}

</mosaic_0001>

<llo_original>
// kernel: tpu_custom_call.1
$region0: #{tpu_custom_call.1}
  #allocation0 [shape = 'u32[]', space=smem, size = 0x4, offset = 0x4, fixed_abs, tag = 'smem constant byte address 0x4 - core index']
  #allocation1 [shape = 'u32[72,128]{1,0:T(1,128)}', space=vmem, size = 0x9000, scoped, tag = 'internal scratch']
  %s0 = inlined_call_operand.vmem [shape: bf16[2,64,40], index: 0, kind: input, shape index: {}]
  %s1 = inlined_call_operand.vmem [shape: bf16[40,8], index: 1, kind: input, shape index: {}]
  %s2 = inlined_call_operand.vmem [shape: f32[1,8], index: 2, kind: input, shape index: {}]
  %s3 = inlined_call_operand.vmem [shape: f32[2,64,8], index: 3, kind: output, shape index: {}]
  %s4 = sld [smem:[#allocation0]]
  $region45: #{tpu_custom_call.1} parent=0
    _
  %s6 = ssub.s32 1, %s4
  %s7 = scalar_select 0, %s6, %s4
  loop: start=0, step=1, limit=4
  $region2: #{tpu_custom_call.1} parent=0 // loop_pre_header
    _
  $region3: #{tpu_custom_call.1} parent=0 // loop_header
    %s9 = sphi 0, %s13
    %p10 = scmp.ge.s32.totalorder %s9, 4
    %s16 = sphi 0, %s35
    %s17 = sphi 0, %s31
    %s18 = sphi 0, %s27
    %s19 = sphi 0, %s16
    %s20 = sphi 0, %s17
    %s21 = sphi 0, %s18
    %s22 = sphi 0, %s19
    %s23 = sphi 0, %s20
    %s24 = sphi 0, %s21
    %s40 = sphi 0, %s42
    %s43 = sphi 0, %s40
    %s44 = sphi 0, %s43
    %s60 = sphi 0, %s44
    %s66 = sphi 0, %s68
    %s69 = sphi 0, %s66
    %s70 = sphi 0, %s69
    %s86 = sphi 0, %s70
    %s92 = sphi 0, %s94
    %s95 = sphi 0, %s92
    %s96 = sphi 0, %s95
    %s112 = sphi 0, %s96
    %s122 = sphi 0, %s124
    %s125 = sphi 0, %s122
    %s126 = sphi 0, %s125
    %s142 = sphi 0, %s126
  $region4: #{tpu_custom_call.1} parent=0 // loop_header_branch
    %12 = sbr.rel (%p10) target = $region8
  $region5: #{tpu_custom_call.1} parent=0 // loop_body
    %s14 = ssub.s32 %s9, 1
    %s15 = ssub.s32 %s9, 2
    %s25 = sadd.s32 1, %s18
    %p26 = scmp.ge.s32.totalorder %s25, 1
    %s27 = scalar_select %p26, 0, %s25
    %s28 = sadd.s32 1, %s17
    %s29 = scalar_select %p26, %s28, %s17
    %p30 = scmp.ge.s32.totalorder %s29, 1
    %s31 = scalar_select %p30, 0, %s29
    %s32 = sadd.s32 1, %s16
    %s33 = scalar_select %p30, %s32, %s16
    %p34 = scmp.ge.s32.totalorder %s33, 2
    %s35 = scalar_select %p34, 0, %s33
    %s36 = ssub.s32 %s16, %s35
    %s37 = ssub.s32 %s17, %s31
    %s38 = sor.u32 %s36, %s37
    %p39 = scmp.eq.s32.totalorder %s38, 0
    %s41 = sadd.s32 %s40, 1
    %s42 = scalar_select %p39, %s40, %s41
    %p45 = pneg %p39
    %p46 = scmp.eq.s32.totalorder %s9, 1
    %p47 = por %p45, %p46
    %p48 = scmp.ne.s32.totalorder %s40, %s43
    %p49 = scmp.eq.s32.totalorder %s9, 0
    %p50 = por %p48, %p49
    %p51 = scmp.ne.s32.totalorder %s40, %s43
    %p52 = scmp.eq.s32.totalorder %s14, 1
    %p53 = por %p51, %p52
    %p54 = scmp.ne.s32.totalorder %s43, %s44
    %p55 = scmp.eq.s32.totalorder %s14, 0
    %p56 = por %p54, %p55
    %p57 = scmp.ne.s32.totalorder %s43, %s44
    %p58 = scmp.eq.s32.totalorder %s15, 1
    %p59 = por %p57, %p58
    %p61 = scmp.ne.s32.totalorder %s44, %s60
    %p62 = scmp.eq.s32.totalorder %s15, 0
    %p63 = por %p61, %p62
    %s64 = ssub.s32 %s18, %s27
    %p65 = scmp.eq.s32.totalorder %s64, 0
    %s67 = sadd.s32 %s66, 1
    %s68 = scalar_select %p65, %s66, %s67
    %p71 = pneg %p65
    %p72 = scmp.eq.s32.totalorder %s9, 1
    %p73 = por %p71, %p72
    %p74 = scmp.ne.s32.totalorder %s66, %s69
    %p75 = scmp.eq.s32.totalorder %s9, 0
    %p76 = por %p74, %p75
    %p77 = scmp.ne.s32.totalorder %s66, %s69
    %p78 = scmp.eq.s32.totalorder %s14, 1
    %p79 = por %p77, %p78
    %p80 = scmp.ne.s32.totalorder %s69, %s70
    %p81 = scmp.eq.s32.totalorder %s14, 0
    %p82 = por %p80, %p81
    %p83 = scmp.ne.s32.totalorder %s69, %s70
    %p84 = scmp.eq.s32.totalorder %s15, 1
    %p85 = por %p83, %p84
    %p87 = scmp.ne.s32.totalorder %s70, %s86
    %p88 = scmp.eq.s32.totalorder %s15, 0
    %p89 = por %p87, %p88
    %s90 = ssub.s32 %s18, %s27
    %p91 = scmp.eq.s32.totalorder %s90, 0
    %s93 = sadd.s32 %s92, 1
    %s94 = scalar_select %p91, %s92, %s93
    %p97 = pneg %p91
    %p98 = scmp.eq.s32.totalorder %s9, 1
    %p99 = por %p97, %p98
    %p100 = scmp.ne.s32.totalorder %s92, %s95
    %p101 = scmp.eq.s32.totalorder %s9, 0
    %p102 = por %p100, %p101
    %p103 = scmp.ne.s32.totalorder %s92, %s95
    %p104 = scmp.eq.s32.totalorder %s14, 1
    %p105 = por %p103, %p104
    %p106 = scmp.ne.s32.totalorder %s95, %s96
    %p107 = scmp.eq.s32.totalorder %s14, 0
    %p108 = por %p106, %p107
    %p109 = scmp.ne.s32.totalorder %s95, %s96
    %p110 = scmp.eq.s32.totalorder %s15, 1
    %p111 = por %p109, %p110
    %p113 = scmp.ne.s32.totalorder %s96, %s112
    %p114 = scmp.eq.s32.totalorder %s15, 0
    %p115 = por %p113, %p114
    %s116 = ssub.s32 %s16, %s35
    %s117 = ssub.s32 %s17, %s31
    %s118 = sor.u32 %s116, %s117
    %s119 = ssub.s32 %s18, %s27
    %s120 = sor.u32 %s118, %s119
    %p121 = scmp.eq.s32.totalorder %s120, 0
    %s123 = sadd.s32 %s122, 1
    %s124 = scalar_select %p121, %s122, %s123
    %p127 = pneg %p121
    %p128 = scmp.eq.s32.totalorder %s9, 1
    %p129 = por %p127, %p128
    %p130 = scmp.ne.s32.totalorder %s122, %s125
    %p131 = scmp.eq.s32.totalorder %s9, 0
    %p132 = por %p130, %p131
    %p133 = scmp.ne.s32.totalorder %s122, %s125
    %p134 = scmp.eq.s32.totalorder %s14, 1
    %p135 = por %p133, %p134
    %p136 = scmp.ne.s32.totalorder %s125, %s126
    %p137 = scmp.eq.s32.totalorder %s14, 0
    %p138 = por %p136, %p137
    %p139 = scmp.ne.s32.totalorder %s125, %s126
    %p140 = scmp.eq.s32.totalorder %s15, 1
    %p141 = por %p139, %p140
    %p143 = scmp.ne.s32.totalorder %s126, %s142
    %p144 = scmp.eq.s32.totalorder %s15, 0
    %p145 = por %p143, %p144
    %p146 = scmp.le.s32.totalorder 1, %s9
    %p147 = scmp.lt.s32.totalorder %s9, 3
    %p148 = pnand %p146, %p147
    %p149 = pneg %p148
    // Predicated region
    $region9: #{tpu_custom_call.1} parent=5 // pred_check
      _
    $region10: #{tpu_custom_call.1} parent=5 // pred_check_branch
      %151 = sbr.rel (%p148) target = $region12
    $region11: #{tpu_custom_call.1} parent=5 // pred_region
      %s152 = ssub.s32 %s9, 1
      // Predicated region
      $region13: #{tpu_custom_call.1} parent=11 // pred_check
        %p153 = pneg %p82
      $region14: #{tpu_custom_call.1} parent=11 // pred_check_branch
        %155 = sbr.rel (%p153) target = $region16
      $region15: #{tpu_custom_call.1} parent=11 // pred_region
        %p156 = scmp.lt.s32.totalorder %s21, 0
        %s157 = scalar_select %p156, %s21, 0
        %s158 = smul.addr %s157, 4
        %s159 = scalar_lea.vmem %s1, %s158
      $region16: #{tpu_custom_call.1} parent=11 // pred_fallthru
        _
      // Predicated region
      $region17: #{tpu_custom_call.1} parent=11 // pred_check
        %p160 = pneg %p108
      $region18: #{tpu_custom_call.1} parent=11 // pred_check_branch
        %162 = sbr.rel (%p160) target = $region20
      $region19: #{tpu_custom_call.1} parent=11 // pred_region
        %p163 = scmp.lt.s32.totalorder %s21, 0
        %s164 = scalar_select %p163, %s21, 0
        %s165 = scalar_lea.vmem %s2, %s164
      $region20: #{tpu_custom_call.1} parent=11 // pred_fallthru
        _
    $region12: #{tpu_custom_call.1} parent=5 // pred_fallthru
      _
    %p166 = scmp.lt.s32.totalorder %s9, 2
    // Predicated region
    $region21: #{tpu_custom_call.1} parent=5 // pred_check
      %p167 = pneg %p166
    $region22: #{tpu_custom_call.1} parent=5 // pred_check_branch
      %169 = sbr.rel (%p167) target = $region24
    $region23: #{tpu_custom_call.1} parent=5 // pred_region
      // Predicated region
      $region25: #{tpu_custom_call.1} parent=23 // pred_check
        %p170 = pneg %p50
      $region26: #{tpu_custom_call.1} parent=23 // pred_check_branch
        %172 = sbr.rel (%p170) target = $region28
      $region27: #{tpu_custom_call.1} parent=23 // pred_region
        %s173 = smul.u32 8, %s17
        %p174 = scmp.lt.s32.totalorder %s16, 1
        %s175 = scalar_select %p174, %s16, 1
        %p176 = scmp.lt.s32.totalorder %s173, 7
        %s177 = scalar_select %p176, %s173, 7
        %s178 = smul.addr %s175, 8
        %s179 = sadd.s32 %s177, %s178
        %s180 = smul.addr %s179, 4
        %s181 = scalar_lea.vmem %s0, %s180
        %s182 = smul.u32 8, %s17
      $region28: #{tpu_custom_call.1} parent=23 // pred_fallthru
        _
    $region24: #{tpu_custom_call.1} parent=5 // pred_fallthru
      _
    %p183 = scmp.le.s32.totalorder 1, %s9
    %p184 = scmp.lt.s32.totalorder %s9, 3
    %p185 = pnand %p183, %p184
    %p186 = pneg %p185
    // Predicated region
    $region29: #{tpu_custom_call.1} parent=5 // pred_check
      _
    $region30: #{tpu_custom_call.1} parent=5 // pred_check_branch
      %188 = sbr.rel (%p185) target = $region32
    $region31: #{tpu_custom_call.1} parent=5 // pred_region
      %s189 = ssub.s32 %s9, 1
      %s190 = smul.u32 8, %s20
      %p191 = scmp.lt.s32.totalorder %s19, 1
      %s192 = scalar_select %p191, %s19, 1
      %p193 = scmp.lt.s32.totalorder %s190, 7
      %s194 = scalar_select %p193, %s190, 7
      %s195 = smul.addr %s192, 8
      %s196 = sadd.s32 %s194, %s195
      %s197 = smul.addr %s196, 4
      %s198 = scalar_lea.vmem %s0, %s197
      %p199 = pneg %p56
      %p200 = pneg %p53
      %p201 = scmp.lt.s32.totalorder %s21, 0
      %s202 = scalar_select %p201, %s21, 0
      %s203 = smul.addr %s202, 4
      %s204 = scalar_lea.vmem %s1, %s203
      %p205 = pneg %p82
      %p206 = pneg %p79
      %p207 = scmp.lt.s32.totalorder %s21, 0
      %s208 = scalar_select %p207, %s21, 0
      %s209 = scalar_lea.vmem %s2, %s208
      %p210 = pneg %p108
      %p211 = pneg %p105
      %p212 = pneg %p138
      %p213 = pneg %p135
      %s214 = smul.u32 8, %s20
      %p215 = scmp.lt.s32.totalorder %s19, 1
      %s216 = scalar_select %p215, %s19, 1
      %p217 = scmp.lt.s32.totalorder %s214, 7
      %s218 = scalar_select %p217, %s214, 7
      %p219 = scmp.lt.s32.totalorder %s21, 0
      %s220 = scalar_select %p219, %s21, 0
      %s221 = sadd.s32 %s220, %s218
      %s222 = smul.addr %s216, 8
      %s223 = sadd.s32 %s221, %s222
      %s224 = smul.addr %s223, 8
      %s225 = scalar_lea.vmem %s3, %s224
      %s226 = smul.u32 8, %s20
      %p227 = scmp.lt.s32.totalorder %s19, 1
      %s228 = scalar_select %p227, %s19, 1
      %p229 = scmp.lt.s32.totalorder %s226, 7
      %s230 = scalar_select %p229, %s226, 7
      %s231 = smul.addr %s228, 8
      %s232 = sadd.s32 %s230, %s231
      %s233 = smul.addr %s232, 4
      %s234 = scalar_lea.vmem %s0, %s233
      %s235 = smul.u32 8, %s20
      %p236 = scmp.lt.s32.totalorder %s21, 0
      %s237 = scalar_select %p236, %s21, 0
      %s238 = smul.addr %s237, 4
      %s239 = scalar_lea.vmem %s1, %s238
      %p240 = scmp.lt.s32.totalorder %s21, 0
      %s241 = scalar_select %p240, %s21, 0
      %s242 = scalar_lea.vmem %s2, %s241
      %s243 = smul.u32 8, %s20
      %p244 = scmp.lt.s32.totalorder %s19, 1
      %s245 = scalar_select %p244, %s19, 1
      %p246 = scmp.lt.s32.totalorder %s243, 7
      %s247 = scalar_select %p246, %s243, 7
      %p248 = scmp.lt.s32.totalorder %s21, 0
      %s249 = scalar_select %p248, %s21, 0
      %s250 = sadd.s32 %s249, %s247
      %s251 = smul.addr %s245, 8
      %s252 = sadd.s32 %s250, %s251
      %s253 = smul.addr %s252, 8
      %s254 = scalar_lea.vmem %s3, %s253
      %s255 = smul.u32 8, %s20
      %v257 = vld [vmem:[%s234] sm:$0xf]
      %v258 = vld [vmem:[%s234 + $0x4] sm:$0xf]
      %v259 = vld [vmem:[%s234 + $0x8] sm:$0xf]
      %v260 = vld [vmem:[%s234 + $0xc] sm:$0xf]
      %v261 = vld [vmem:[%s234 + $0x10] sm:$0xf]
      %v262 = vld [vmem:[%s234 + $0x14] sm:$0xf]
      %v263 = vld [vmem:[%s234 + $0x18] sm:$0xf]
      %v264 = vld [vmem:[%s234 + $0x1c] sm:$0xf]
      %v265 = vld [vmem:[%s239] sm:$0xf]
      %v266 = vld [vmem:[%s239 + $0x4] sm:$0xf]
      %v267 = vld [vmem:[%s239 + $0x8] sm:$0xf]
      %v268 = vld [vmem:[%s239 + $0xc] sm:$0xf]
      %v269 = vld [vmem:[%s239 + $0x10] sm:$0xf]
      %v270 = vld [vmem:[%s242] sm:$0x1]
      %v272 = vperm.slane %v270, 0
      %v282 = vunpack.c.l.b16 %v257
      %v283 = vunpack.c.l.b16 %v258
      %v284 = vunpack.c.l.b16 %v259
      %v285 = vunpack.c.l.b16 %v260
      %v286 = vunpack.c.l.b16 %v261
      %v287 = vunpack.c.l.b16 %v262
      %v288 = vunpack.c.l.b16 %v263
      %v289 = vunpack.c.l.b16 %v264
      %v290 = vpack.c.b16 %v283, %v282
      %v291 = vpack.c.b16 %v285, %v284
      %v292 = vpack.c.b16 %v287, %v286
      %v293 = vpack.c.b16 %v289, %v288
      %v299 = vunpack.c.l.b16 %v265
      %v300 = vunpack.c.l.b16 %v266
      %v301 = vunpack.c.l.b16 %v267
      %v302 = vunpack.c.l.b16 %v268
      %v303 = vunpack.c.l.b16 %v269
      %v304 = vpack.c.b16 %v300, %v299
      %v305 = vpack.c.b16 %v302, %v301
      %v306 = vpack.c.b16 %v303, %v303
      %vm309 = vcmask 326656
      %v311 = vsel %vm309, %v290, 0
      %v314 = vsel %vm309, %v291, 0
      %v317 = vsel %vm309, %v292, 0
      %v320 = vsel %vm309, %v293, 0
      %vm322 = vcmask 1043456
      %v324 = vsel %vm322, %v306, 0
      %326 = vmatpush.bf16.msra.mxu0 0
      %327 = vmatpush.bf16.msra.mxu0 0
      %328 = vmatpush.bf16.msra.mxu0 0
      %329 = vmatpush.bf16.msra.mxu0 0
      %330 = vmatpush.bf16.msra.mxu0 0
      %331 = vmatpush.bf16.msra.mxu0 %v324
      %332 = vmatpush.bf16.msra.mxu0 %v305
      %333 = vmatpush.bf16.msra.mxu0 %v304
      %334 = vmatmul.bf16.gmra.mxu0 %v311
      %v335 = vpop.f32.mrf.mxu0
      %v336 = vadd.f32 %v272, %v335
      %v337 = vpop.f32.mrf.mxu0
      %v338 = vadd.f32 %v272, %v337
      %339 = vmatmul.bf16.gmra.mxu0 %v314
      %v340 = vpop.f32.mrf.mxu0
      %v341 = vadd.f32 %v272, %v340
      %v342 = vpop.f32.mrf.mxu0
      %v343 = vadd.f32 %v272, %v342
      %344 = vmatmul.bf16.gmra.mxu0 %v317
      %v345 = vpop.f32.mrf.mxu0
      %v346 = vadd.f32 %v272, %v345
      %v347 = vpop.f32.mrf.mxu0
      %v348 = vadd.f32 %v272, %v347
      %349 = vmatmul.bf16.gmra.mxu0 %v320
      %v350 = vpop.f32.mrf.mxu0
      %v351 = vadd.f32 %v272, %v350
      %v352 = vpop.f32.mrf.mxu0
      %v353 = vadd.f32 %v272, %v352
      %354 = vdwg.mxu0
      %vm355 = vcmask 64512
      %356 = vst.msk [vmem:[%s254] sm:$0xff] %vm355, %v336
      %357 = vst.msk [vmem:[%s254 + $0x8] sm:$0xff] %vm355, %v338
      %358 = vst.msk [vmem:[%s254 + $0x10] sm:$0xff] %vm355, %v341
      %359 = vst.msk [vmem:[%s254 + $0x18] sm:$0xff] %vm355, %v343
      %360 = vst.msk [vmem:[%s254 + $0x20] sm:$0xff] %vm355, %v346
      %361 = vst.msk [vmem:[%s254 + $0x28] sm:$0xff] %vm355, %v348
      %362 = vst.msk [vmem:[%s254 + $0x30] sm:$0xff] %vm355, %v351
      %363 = vst.msk [vmem:[%s254 + $0x38] sm:$0xff] %vm355, %v353
      %s364 = smul.u32 8, %s20
      %p365 = scmp.lt.s32.totalorder %s19, 1
      %s366 = scalar_select %p365, %s19, 1
      %p367 = scmp.lt.s32.totalorder %s364, 7
      %s368 = scalar_select %p367, %s364, 7
      %p369 = scmp.lt.s32.totalorder %s21, 0
      %s370 = scalar_select %p369, %s21, 0
      %s371 = sadd.s32 %s370, %s368
      %s372 = smul.addr %s366, 8
      %s373 = sadd.s32 %s371, %s372
      %s374 = smul.addr %s373, 8
      %s375 = scalar_lea.vmem %s3, %s374
      // Predicated region
      $region33: #{tpu_custom_call.1} parent=31 // pred_check
        %p376 = pneg %p135
      $region34: #{tpu_custom_call.1} parent=31 // pred_check_branch
        %378 = sbr.rel (%p376) target = $region36
      $region35: #{tpu_custom_call.1} parent=31 // pred_region
        %s379 = smul.u32 8, %s20
      $region36: #{tpu_custom_call.1} parent=31 // pred_fallthru
        _
    $region32: #{tpu_custom_call.1} parent=5 // pred_fallthru
      _
    %p380 = scmp.le.s32.totalorder 2, %s9
    // Predicated region
    $region37: #{tpu_custom_call.1} parent=5 // pred_check
      %p381 = pneg %p380
    $region38: #{tpu_custom_call.1} parent=5 // pred_check_branch
      %383 = sbr.rel (%p381) target = $region40
    $region39: #{tpu_custom_call.1} parent=5 // pred_region
      %s384 = ssub.s32 %s9, 2
      // Predicated region
      $region41: #{tpu_custom_call.1} parent=39 // pred_check
        %p385 = pneg %p141
      $region42: #{tpu_custom_call.1} parent=39 // pred_check_branch
        %387 = sbr.rel (%p385) target = $region44
      $region43: #{tpu_custom_call.1} parent=39 // pred_region
        %s388 = smul.u32 8, %s23
        %p389 = scmp.lt.s32.totalorder %s22, 1
        %s390 = scalar_select %p389, %s22, 1
        %p391 = scmp.lt.s32.totalorder %s388, 7
        %s392 = scalar_select %p391, %s388, 7
        %p393 = scmp.lt.s32.totalorder %s24, 0
        %s394 = scalar_select %p393, %s24, 0
        %s395 = sadd.s32 %s394, %s392
        %s396 = smul.addr %s390, 8
        %s397 = sadd.s32 %s395, %s396
        %s398 = smul.addr %s397, 8
        %s399 = scalar_lea.vmem %s3, %s398
      $region44: #{tpu_custom_call.1} parent=39 // pred_fallthru
        _
    $region40: #{tpu_custom_call.1} parent=5 // pred_fallthru
      _
  $region6: #{tpu_custom_call.1} parent=0 // loop_footer
    %s13 = sadd.s32 1, %s9
  $region7: #{tpu_custom_call.1} parent=0 // loop_footer_branch
    %8 = sbr.rel target = $region3
  $region8: #{tpu_custom_call.1} parent=0 // loop_exit
    _

</llo_original>
